<compile_context>
chip_gen: v7x
topology: tpu7x:2x2x1
jax: 0.10.0
libtpu: 0.0.40
codegen_flags: <defaults>
</compile_context>

<pallas_src>
import jax
import jax.numpy as jnp
from jax.experimental import pallas as pl
from jax.experimental.pallas import tpu as pltpu


def _critic_kernel_o1(x_ref, w1_ref, b1_ref, w2col_ref, b2_ref, out_ref):
    """Specialized kernel for n_outputs == 1 (the value head), batch on lanes.

    x_ref:     (F, TB)   input tile, batch on lanes
    w1_ref:    (H, F)    layer-1 weight (PyTorch [out, in] layout, no transpose)
    b1_ref:    (H, 1)    layer-1 bias column (broadcasts over lanes)
    w2col_ref: (H, 1)    layer-2 weight as a column (broadcasts over lanes)
    b2_ref:    (1,)      layer-2 bias scalar in SMEM
    out_ref:   (1, TB)   lane-dense output tile
    """
    # Layer 1 on the MXU: (H, F) @ (F, TB) -> (H, TB); bias + ReLU on the VPU.
    h = jnp.dot(w1_ref[...], x_ref[...], preferred_element_type=jnp.float32)
    h = jnp.maximum(h + b1_ref[...], 0.0)
    # Layer 2 (O == 1): VPU mul + sublane reduction over H -> (1, TB), already
    # in the lane-dense store layout.  An MXU pass with N=1 would waste the
    # systolic array and still pay push/pop latency.
    v = jnp.sum(h * w2col_ref[...], axis=0, keepdims=True) + b2_ref[0]
    out_ref[...] = v.astype(out_ref.dtype)


def _critic_kernel_general(x_ref, w1_ref, b1_ref, w2_ref, b2_ref, out_ref):
    """General kernel for n_outputs > 1, batch on lanes.

    w2_ref: (O, H), b2_ref: (O, 1), out_ref: (O, TB).
    """
    h = jnp.dot(w1_ref[...], x_ref[...], preferred_element_type=jnp.float32)
    h = jnp.maximum(h + b1_ref[...], 0.0)
    v = jnp.dot(w2_ref[...], h, preferred_element_type=jnp.float32) + b2_ref[...]
    out_ref[...] = v.astype(out_ref.dtype)


def _round_up(n, m):
    return ((n + m - 1) // m) * m


def _cdiv(a, b):
    return -(-a // b)


def critic_forward(x, w1, b1, w2, b2, *, max_batch_tile=2048):
    """Forward pass of Critic_Net.

    x:  (B, F)          activations
    w1: (H, F), b1: (H,)   -- PyTorch nn.Linear layout [out, in]
    w2: (O, H), b2: (O,)
    returns (B, O)
    """
    B, F = x.shape
    H, _ = w1.shape
    O, _ = w2.shape

    # --- batch tiling ---------------------------------------------------
    # Near-divisor tiling bounds padding to < 128 rows per tile.  Force at
    # least 2 grid steps when B is large so the "parallel" batch axis can be
    # sharded across v7x's two TensorCores (no-op on v5e/v6e).
    n_tiles = max(1, _cdiv(B, max_batch_tile))
    if n_tiles == 1 and B > 1024:
        n_tiles = 2
    if n_tiles == 1:
        TB = B               # block == full array dim -> any size is legal
        B_pad = B
    else:
        TB = _round_up(_cdiv(B, n_tiles), 128)   # lane dim: multiple of 128
        B_pad = _round_up(B, TB)
    grid = (B_pad // TB,)

    # --- batch-on-lanes layout (free wrapper-side plumbing) --------------
    x_t = jnp.asarray(x).T                      # (F, B)
    if B_pad != B:
        x_t = jnp.pad(x_t, ((0, 0), (0, B_pad - B)))

    w1_arg = jnp.asarray(w1)                    # (H, F) -- no in-kernel .T
    b1_col = jnp.asarray(b1).reshape(H, 1)      # broadcasts over lanes

    if O == 1:
        kernel = _critic_kernel_o1
        w2_arg = jnp.asarray(w2).reshape(H, 1)  # column for VPU mul + reduce
        b2_arg = jnp.asarray(b2).reshape(1)     # single f32 scalar -> SMEM
        w2_spec = pl.BlockSpec((H, 1), lambda i: (0, 0))
        b2_spec = pl.BlockSpec(memory_space=pltpu.MemorySpace.SMEM)
    else:
        kernel = _critic_kernel_general
        w2_arg = jnp.asarray(w2)                # (O, H)
        b2_arg = jnp.asarray(b2).reshape(O, 1)
        w2_spec = pl.BlockSpec((O, H), lambda i: (0, 0))
        b2_spec = pl.BlockSpec((O, 1), lambda i: (0, 0))

    out_t = pl.pallas_call(
        kernel,
        out_shape=jax.ShapeDtypeStruct((O, B_pad), x.dtype),   # lane-dense slab
        grid_spec=pltpu.PrefetchScalarGridSpec(
            num_scalar_prefetch=0,
            grid=grid,
            in_specs=[
                pl.BlockSpec((F, TB), lambda i: (0, i)),   # x tile, batch on lanes
                pl.BlockSpec((H, F), lambda i: (0, 0)),    # W1 (resident)
                pl.BlockSpec((H, 1), lambda i: (0, 0)),    # b1 column
                w2_spec,                                    # W2 (column or (O,H))
                b2_spec,                                    # b2 (SMEM or VMEM)
            ],
            out_specs=pl.BlockSpec((O, TB), lambda i: (0, i)),
        ),
        compiler_params=pltpu.CompilerParams(
            dimension_semantics=("parallel",)),
    )(x_t, w1_arg, b1_col, w2_arg, b2_arg)

    # Transpose back to (B, O); slice off padded batch columns.
    return out_t[:, :B].T


if __name__ == "__main__":
    # Shapes consistent with Critic_Net(n_features, n_hidden, n_outputs=1).
    B, n_features, n_hidden, n_outputs = 8, 4, 32, 1

    key = jax.random.PRNGKey(0)
    kx, kw1, kb1, kw2, kb2 = jax.random.split(key, 5)

    x = jax.random.normal(kx, (B, n_features), dtype=jnp.float32)
    # PyTorch-shaped parameters: nn.Linear stores [out_features, in_features].
    w1 = jax.random.normal(kw1, (n_hidden, n_features), dtype=jnp.float32) * 0.1
    b1 = jax.random.normal(kb1, (n_hidden,), dtype=jnp.float32) * 0.1
    w2 = jax.random.normal(kw2, (n_outputs, n_hidden), dtype=jnp.float32) * 0.1
    b2 = jax.random.normal(kb2, (n_outputs,), dtype=jnp.float32) * 0.1

    out = jax.block_until_ready(critic_forward(x, w1, b1, w2, b2))
    ref = jnp.maximum(x @ w1.T + b1, 0.0) @ w2.T + b2
    assert out.shape == (B, n_outputs)
    assert jnp.allclose(out, ref, atol=1e-5, rtol=1e-5)

    # General (n_outputs > 1) kernel, single-tile path.
    B2, O2 = 10, 3
    kx2, kw2b, kb2b = jax.random.split(jax.random.PRNGKey(1), 3)
    x2 = jax.random.normal(kx2, (B2, n_features), dtype=jnp.float32)
    w2b = jax.random.normal(kw2b, (O2, n_hidden), dtype=jnp.float32) * 0.1
    b2b = jax.random.normal(kb2b, (O2,), dtype=jnp.float32) * 0.1
    out2 = jax.block_until_ready(critic_forward(x2, w1, b1, w2b, b2b))
    ref2 = jnp.maximum(x2 @ w1.T + b1, 0.0) @ w2b.T + b2b
    assert out2.shape == (B2, O2)
    assert jnp.allclose(out2, ref2, atol=1e-5, rtol=1e-5)

    # Multi-tile + batch-padding path (small max_batch_tile to force a grid of 3).
    B3 = 300
    x3 = jax.random.normal(jax.random.PRNGKey(2), (B3, n_features), dtype=jnp.float32)
    out3 = jax.block_until_ready(critic_forward(x3, w1, b1, w2, b2, max_batch_tile=128))
    ref3 = jnp.maximum(x3 @ w1.T + b1, 0.0) @ w2.T + b2
    assert out3.shape == (B3, n_outputs)
    assert jnp.allclose(out3, ref3, atol=1e-5, rtol=1e-5)

    # NOTE: at these tiny shapes the op is fixed-overhead bound; in a real AC
    # training loop this MLP should be fused into the surrounding kernel or
    # called with large batches so the parallel batch grid can pipeline.
    print("KERNEL_OK")
</pallas_src>

<mosaic_0001>
module attributes {stable_mosaic.version = 11 : i64} {
  func.func @_critic_kernel_o1(%arg0: i32, %arg1: memref<4x8xf32, #tpu.memory_space<vmem>>, %arg2: memref<32x4xf32, #tpu.memory_space<vmem>>, %arg3: memref<32x1xf32, #tpu.memory_space<vmem>>, %arg4: memref<32x1xf32, #tpu.memory_space<vmem>>, %arg5: memref<1xf32, #tpu.memory_space<smem>>, %arg6: memref<1x8xf32, #tpu.memory_space<vmem>>) attributes {dimension_semantics = [#tpu.dimension_semantics<parallel>], iteration_bounds = array<i64: 1>, scalar_prefetch = 0 : i64, scratch_operands = 0 : i64, tpu.core_type = #tpu.core_type<tc>, window_params = [{transform_indices = @transform_0, window_bounds = array<i64: 4, 8>}, {pipeline_mode = #tpu.pipeline_mode<synchronous>, transform_indices = @transform_1, window_bounds = array<i64: 32, 4>}, {pipeline_mode = #tpu.pipeline_mode<synchronous>, transform_indices = @transform_2, window_bounds = array<i64: 32, 1>}, {pipeline_mode = #tpu.pipeline_mode<synchronous>, transform_indices = @transform_3, window_bounds = array<i64: 32, 1>}, {transform_indices = @transform_4, window_bounds = array<i64: 1>}, {transform_indices = @transform_5, window_bounds = array<i64: 1, 8>}]} {
    %c0 = arith.constant 0 : index
    %c0_0 = arith.constant 0 : index
    %0 = vector.load %arg2[%c0, %c0_0] : memref<32x4xf32, #tpu.memory_space<vmem>>, vector<32x4xf32>
    %c0_1 = arith.constant 0 : index
    %c0_2 = arith.constant 0 : index
    %1 = vector.load %arg1[%c0_1, %c0_2] : memref<4x8xf32, #tpu.memory_space<vmem>>, vector<4x8xf32>
    %cst = arith.constant dense<0.000000e+00> : vector<32x8xf32>
    %2 = tpu.matmul %0, %1, %cst {dimension_numbers = #tpu.dot_dimension_numbers<[1], [0], [0], [1], [0, 0, 1, 1], [], []>} : vector<32x4xf32>, vector<4x8xf32>, vector<32x8xf32> -> vector<32x8xf32>
    %c0_3 = arith.constant 0 : index
    %c0_4 = arith.constant 0 : index
    %3 = vector.load %arg3[%c0_3, %c0_4] : memref<32x1xf32, #tpu.memory_space<vmem>>, vector<32x1xf32>
    %4 = vector.broadcast %3 : vector<32x1xf32> to vector<32x8xf32>
    %5 = arith.addf %2, %4 : vector<32x8xf32>
    %cst_5 = arith.constant 0.000000e+00 : f32
    %6 = vector.broadcast %cst_5 : f32 to vector<32x8xf32>
    %7 = arith.maximumf %5, %6 : vector<32x8xf32>
    %c0_6 = arith.constant 0 : index
    %c0_7 = arith.constant 0 : index
    %8 = vector.load %arg4[%c0_6, %c0_7] : memref<32x1xf32, #tpu.memory_space<vmem>>, vector<32x1xf32>
    %9 = vector.broadcast %8 : vector<32x1xf32> to vector<32x8xf32>
    %10 = arith.mulf %7, %9 : vector<32x8xf32>
    %cst_8 = arith.constant dense<0.000000e+00> : vector<8xf32>
    %11 = vector.multi_reduction <add>, %10, %cst_8 [0] : vector<32x8xf32> to vector<8xf32>
    %12 = vector.shape_cast %11 : vector<8xf32> to vector<1x8xf32>
    %c0_9 = arith.constant 0 : index
    %13 = memref.load %arg5[%c0_9] : memref<1xf32, #tpu.memory_space<smem>>
    %14 = vector.broadcast %13 : f32 to vector<1x8xf32>
    %15 = arith.addf %12, %14 : vector<1x8xf32>
    %c0_10 = arith.constant 0 : index
    %c0_11 = arith.constant 0 : index
    %16 = vector.load %arg6[%c0_10, %c0_11] : memref<1x8xf32, #tpu.memory_space<vmem>>, vector<1x8xf32>
    tpu.vector_store %arg6[%c0_10, %c0_11], %15 {strides = array<i32>} : memref<1x8xf32, #tpu.memory_space<vmem>>, vector<1x8xf32>,
    return
  }
  func.func @transform_0(%arg0: i32) -> (i32, i32) {
    %c0_i32 = arith.constant 0 : i32
    %c0_i32_0 = arith.constant 0 : i32
    return %c0_i32, %arg0 : i32, i32
  }
  func.func @transform_1(%arg0: i32) -> (i32, i32) {
    %c0_i32 = arith.constant 0 : i32
    %c0_i32_0 = arith.constant 0 : i32
    %c0_i32_1 = arith.constant 0 : i32
    return %c0_i32, %c0_i32_0 : i32, i32
  }
  func.func @transform_2(%arg0: i32) -> (i32, i32) {
    %c0_i32 = arith.constant 0 : i32
    %c0_i32_0 = arith.constant 0 : i32
    %c0_i32_1 = arith.constant 0 : i32
    return %c0_i32, %c0_i32_0 : i32, i32
  }
  func.func @transform_3(%arg0: i32) -> (i32, i32) {
    %c0_i32 = arith.constant 0 : i32
    %c0_i32_0 = arith.constant 0 : i32
    %c0_i32_1 = arith.constant 0 : i32
    return %c0_i32, %c0_i32_0 : i32, i32
  }
  func.func @transform_4(%arg0: i32) -> i32 {
    %c0_i32 = arith.constant 0 : i32
    %c0_i32_0 = arith.constant 0 : i32
    return %c0_i32 : i32
  }
  func.func @transform_5(%arg0: i32) -> (i32, i32) {
    %c0_i32 = arith.constant 0 : i32
    %c0_i32_0 = arith.constant 0 : i32
    return %c0_i32, %arg0 : i32, i32
  }
}

</mosaic_0001>

<llo_original>
// kernel: tpu_custom_call.1
$region0: #{tpu_custom_call.1}
  #allocation0 [shape = 'u32[]', space=smem, size = 0x4, offset = 0x4, fixed_abs, tag = 'smem constant byte address 0x4 - core index']
  #allocation1 [shape = 'u32[144,128]{1,0:T(1,128)}', space=vmem, size = 0x12000, scoped, tag = 'internal scratch']
  #allocation2 [shape = 'f32[1]{0:T(128)S(6)}', space=smem, size = 0x200, scoped, tag = 'scoped memory for tpu_custom_call.1']
  %s0 = inlined_call_operand.vmem [shape: f32[4,8], index: 0, kind: input, shape index: {}]
  %s1 = inlined_call_operand.vmem [shape: f32[32,4], index: 1, kind: input, shape index: {}]
  %s2 = inlined_call_operand.vmem [shape: f32[32,1], index: 2, kind: input, shape index: {}]
  %s3 = inlined_call_operand.vmem [shape: f32[32,1], index: 3, kind: input, shape index: {}]
  %s4 = inlined_call_operand.<no memory space> [shape: f32[1], index: 4, kind: input, shape index: {}]
  %s5 = inlined_call_operand.hbm [shape: f32[1,8], index: 5, kind: output, shape index: {}]
  %s6 = sld [smem:[#allocation0]]
  $region30: #{tpu_custom_call.1} parent=0
    _
  %s8 = ssub.s32 1, %s6
  %s9 = scalar_select 0, %s8, %s6
  %10 = sst [smem:[#allocation2]] %s4
  $region1: #{tpu_custom_call.1} parent=0
    #allocation3 [shape = 'u8[512]{0}', space=vmem, size = 0x400, scoped, tag = 'output window, operand 0, single buffered']
    #allocation4 [shape = 's32[1]{0}', space=sflag, size = 0x4, scoped, tag = 'scoped memory for tpu_custom_call.1']
    %11 = vsyncpa [#allocation4], 0
    // Predicated region
    $region2: #{tpu_custom_call.1} parent=1 // pred_check
      _
    $region3: #{tpu_custom_call.1} parent=1 // pred_check_branch
      %13 = sbr.rel (0) target = $region5
    $region4: #{tpu_custom_call.1} parent=1 // pred_region
      _
    $region5: #{tpu_custom_call.1} parent=1 // pred_fallthru
      _
    // Predicated region
    $region6: #{tpu_custom_call.1} parent=1 // pred_check
      _
    $region7: #{tpu_custom_call.1} parent=1 // pred_check_branch
      %15 = sbr.rel (0) target = $region9
    $region8: #{tpu_custom_call.1} parent=1 // pred_region
      _
    $region9: #{tpu_custom_call.1} parent=1 // pred_fallthru
      _
    // Predicated region
    $region10: #{tpu_custom_call.1} parent=1 // pred_check
      _
    $region11: #{tpu_custom_call.1} parent=1 // pred_check_branch
      %17 = sbr.rel (0) target = $region13
    $region12: #{tpu_custom_call.1} parent=1 // pred_region
      _
    $region13: #{tpu_custom_call.1} parent=1 // pred_fallthru
      _
    // Predicated region
    $region14: #{tpu_custom_call.1} parent=1 // pred_check
      _
    $region15: #{tpu_custom_call.1} parent=1 // pred_check_branch
      %19 = sbr.rel (0) target = $region17
    $region16: #{tpu_custom_call.1} parent=1 // pred_region
      _
    $region17: #{tpu_custom_call.1} parent=1 // pred_fallthru
      _
    // Predicated region
    $region18: #{tpu_custom_call.1} parent=1 // pred_check
      _
    $region19: #{tpu_custom_call.1} parent=1 // pred_check_branch
      %21 = sbr.rel (0) target = $region21
    $region20: #{tpu_custom_call.1} parent=1 // pred_region
      _
    $region21: #{tpu_custom_call.1} parent=1 // pred_fallthru
      _
    %v22 = vld [vmem:[%s1] sm:$0xff]
    %v23 = vld [vmem:[%s1 + $0x8] sm:$0xff]
    %v24 = vld [vmem:[%s1 + $0x10] sm:$0xff]
    %v25 = vld [vmem:[%s1 + $0x18] sm:$0xff]
    %v26 = vld [vmem:[%s0] sm:$0xf]
    %v27 = vld [vmem:[%s2] sm:$0xff]
    %v28 = vld [vmem:[%s2 + $0x8] sm:$0xff]
    %v29 = vld [vmem:[%s2 + $0x10] sm:$0xff]
    %v30 = vld [vmem:[%s2 + $0x18] sm:$0xff]
    %32 = vset.pattern.permute.xlu0 0
    %33 = vperm.xlu0 %32, %v27
    %v34 = vpop.permute.xlu0 %33
    %37 = vset.pattern.permute.xlu0 0
    %38 = vperm.xlu0 %37, %v28
    %v39 = vpop.permute.xlu0 %38
    %42 = vset.pattern.permute.xlu0 0
    %43 = vperm.xlu0 %42, %v29
    %v44 = vpop.permute.xlu0 %43
    %47 = vset.pattern.permute.xlu0 0
    %48 = vperm.xlu0 %47, %v30
    %v49 = vpop.permute.xlu0 %48
    %vm51 = vcmask 31744
    %v53 = vsel %vm51, %v22, 0
    %v56 = vsel %vm51, %v23, 0
    %v59 = vsel %vm51, %v24, 0
    %v62 = vsel %vm51, %v25, 0
    %vm64 = vcmask 1043456
    %v66 = vsel %vm64, %v26, 0
    %68 = vmatprep.subr.mxu0 0.0
    %69 = vmatpush1.msra.mxu0 %v66
    %70 = vmatprep.subr.mxu0 0.0
    %71 = vmatpush1.msra.mxu0 0.0
    %72 = vmatprep.subr.mxu0 0.0
    %73 = vmatpush1.msra.mxu0 0.0
    %74 = vmatprep.subr.mxu0 0.0
    %75 = vmatpush1.msra.mxu0 0.0
    %76 = vmatprep.subr.mxu0 0.0
    %77 = vmatpush1.msra.mxu0 0.0
    %78 = vmatprep.subr.mxu0 0.0
    %79 = vmatpush1.msra.mxu0 0.0
    %80 = vmatprep.subr.mxu0 0.0
    %81 = vmatpush1.msra.mxu0 0.0
    %82 = vmatprep.subr.mxu0 0.0
    %83 = vmatpush1.msra.mxu0 0.0
    %84 = vmatprep.subr.mxu0 0.0
    %85 = vmatpush1.msra.mxu0 0.0
    %86 = vmatprep.subr.mxu0 0.0
    %87 = vmatpush1.msra.mxu0 0.0
    %88 = vmatprep.subr.mxu0 0.0
    %89 = vmatpush1.msra.mxu0 0.0
    %90 = vmatprep.subr.mxu0 0.0
    %91 = vmatpush1.msra.mxu0 0.0
    %92 = vmatprep.subr.mxu0 0.0
    %93 = vmatpush1.msra.mxu0 0.0
    %94 = vmatprep.subr.mxu0 0.0
    %95 = vmatpush1.msra.mxu0 0.0
    %96 = vmatprep.subr.mxu0 0.0
    %97 = vmatpush1.msra.mxu0 0.0
    %98 = vmatprep.subr.mxu0 0.0
    %99 = vmatpush1.msra.mxu0 0.0
    %100 = vmatprep.subr.mxu0 0.0
    %101 = vmatpush1.msra.mxu0 0.0
    %102 = vmatprep.subr.mxu0 0.0
    %103 = vmatpush1.msra.mxu0 0.0
    %104 = vmatprep.subr.mxu0 0.0
    %105 = vmatpush1.msra.mxu0 0.0
    %106 = vmatprep.subr.mxu0 0.0
    %107 = vmatpush1.msra.mxu0 0.0
    %108 = vmatprep.subr.mxu0 0.0
    %109 = vmatpush1.msra.mxu0 0.0
    %110 = vmatprep.subr.mxu0 0.0
    %111 = vmatpush1.msra.mxu0 0.0
    %112 = vmatprep.subr.mxu0 0.0
    %113 = vmatpush1.msra.mxu0 0.0
    %114 = vmatprep.subr.mxu0 0.0
    %115 = vmatpush1.msra.mxu0 0.0
    %116 = vmatprep.subr.mxu0 0.0
    %117 = vmatpush1.msra.mxu0 0.0
    %118 = vmatprep.subr.mxu0 0.0
    %119 = vmatpush1.msra.mxu0 0.0
    %120 = vmatprep.subr.mxu0 0.0
    %121 = vmatpush1.msra.mxu0 0.0
    %122 = vmatprep.subr.mxu0 0.0
    %123 = vmatpush1.msra.mxu0 0.0
    %124 = vmatprep.subr.mxu0 0.0
    %125 = vmatpush1.msra.mxu0 0.0
    %126 = vmatprep.subr.mxu0 0.0
    %127 = vmatpush1.msra.mxu0 0.0
    %128 = vmatprep.subr.mxu0 0.0
    %129 = vmatpush1.msra.mxu0 0.0
    %130 = vmatprep.subr.mxu0 0.0
    %131 = vmatpush1.msra.mxu0 0.0
    %132 = vmatprep.mubr.f32.mxu0 0.0
    %133 = vmatmul.mubr.f32.gmra.mrb[0].mxu0 %v53
    %v134 = vpop.f32.mrb[0].mxu0
    %v135 = vadd.f32 %v34, %v134
    %v136 = vpop.f32.mrb[0].mxu0
    %137 = vmatprep.mubr.f32.mxu0 0.0
    %138 = vmatmul.mubr.f32.gmra.mrb[0].mxu0 %v56
    %v139 = vpop.f32.mrb[0].mxu0
    %v140 = vadd.f32 %v39, %v139
    %v141 = vpop.f32.mrb[0].mxu0
    %142 = vmatprep.mubr.f32.mxu0 0.0
    %143 = vmatmul.mubr.f32.gmra.mrb[0].mxu0 %v59
    %v144 = vpop.f32.mrb[0].mxu0
    %v145 = vadd.f32 %v44, %v144
    %v146 = vpop.f32.mrb[0].mxu0
    %147 = vmatprep.mubr.f32.mxu0 0.0
    %148 = vmatmul.mubr.f32.gmra.mrb[0].mxu0 %v62
    %v149 = vpop.f32.mrb[0].mxu0
    %v150 = vadd.f32 %v49, %v149
    %v151 = vpop.f32.mrb[0].mxu0
    %152 = vdwg.mxu0
    %v153 = vmax.f32 %v135, 0.0
    %v154 = vmax.f32 %v140, 0.0
    %v155 = vmax.f32 %v145, 0.0
    %v156 = vmax.f32 %v150, 0.0
    %v157 = vld [vmem:[%s3] sm:$0xff]
    %v158 = vld [vmem:[%s3 + $0x8] sm:$0xff]
    %v159 = vld [vmem:[%s3 + $0x10] sm:$0xff]
    %v160 = vld [vmem:[%s3 + $0x18] sm:$0xff]
    %162 = vset.pattern.permute.xlu0 0
    %163 = vperm.xlu0 %162, %v157
    %v164 = vpop.permute.xlu0 %163
    %167 = vset.pattern.permute.xlu0 0
    %168 = vperm.xlu0 %167, %v158
    %v169 = vpop.permute.xlu0 %168
    %172 = vset.pattern.permute.xlu0 0
    %173 = vperm.xlu0 %172, %v159
    %v174 = vpop.permute.xlu0 %173
    %177 = vset.pattern.permute.xlu0 0
    %178 = vperm.xlu0 %177, %v160
    %v179 = vpop.permute.xlu0 %178
    %v181 = vmul.f32 %v153, %v164
    %v182 = vmul.f32 %v154, %v169
    %v183 = vmul.f32 %v155, %v174
    %v184 = vmul.f32 %v156, %v179
    %vm185 = vcmask 64512
    %v186 = vsel %vm185, %v181, 0.0
    %v187 = vsel %vm185, %v182, 0.0
    %v188 = vadd.f32 %v186, %v187
    %v189 = vsel %vm185, %v183, 0.0
    %v190 = vadd.f32 %v188, %v189
    %v191 = vsel %vm185, %v184, 0.0
    %v192 = vadd.f32 %v190, %v191
    %v193 = vrot.slane %v192, 4
    %v194 = vadd.f32 %v192, %v193
    %v195 = vrot.slane %v194, 2
    %v196 = vadd.f32 %v194, %v195
    %v197 = vrot.slane %v196, 1
    %v198 = vadd.f32 %v196, %v197
    %s199 = sld [smem:[#allocation2]]
    %v200 = vstv %s199
    %v201 = vadd.f32 %v198, %v200
    %vm202 = vcmask 57344
    %203 = vst.msk [vmem:[#allocation3] sm:$0x1] %vm202, %v201
    // Predicated region
    $region22: #{tpu_custom_call.1} parent=1 // pred_check
      _
    $region23: #{tpu_custom_call.1} parent=1 // pred_check_branch
      %205 = sbr.rel (0) target = $region25
    $region24: #{tpu_custom_call.1} parent=1 // pred_region
      %s207 = ssub.s32 16, 16
      %208 = vsyncadd [#allocation4], %s207
      %s210 = sshll.u32 [#allocation3], 4
      %s211 = int_to_ptr.vmem [resolvable:$true] %s210
      %213 = dma.vmem_to_hbm [thread:$0]  %s211, 16, %s5, [#allocation4]
    $region25: #{tpu_custom_call.1} parent=1 // pred_fallthru
      _
    // Predicated region
    $region26: #{tpu_custom_call.1} parent=1 // pred_check
      _
    $region27: #{tpu_custom_call.1} parent=1 // pred_check_branch
      %215 = sbr.rel (0) target = $region29
    $region28: #{tpu_custom_call.1} parent=1 // pred_region
      %216 = dma.done [#allocation4], 16
    $region29: #{tpu_custom_call.1} parent=1 // pred_fallthru
      _
    %217 = vsyncpa [#allocation4], 1

</llo_original>
